<compile_context>
chip_gen: v6e
topology: v6e:2x2x1
jax: 0.10.0
libtpu: 0.0.40
codegen_flags: <defaults>
</compile_context>

<pallas_src>
import jax
import jax.numpy as jnp
from jax.experimental import pallas as pl
from jax.experimental.pallas import tpu as pltpu


def _gru_cell_kernel(wxh_ref, wch_ref, b_ref, x_ref, h_ref, out_ref, xh_ref):
    E = h_ref.shape[0]
    h = h_ref[...]                                   # (E, TN) f32

    # Assemble [x; h] once in VMEM (tiny sublane copy) so the r/u/c
    # input-side projections collapse into ONE fused MXU dot.
    xh_ref[:E, :] = x_ref[...].astype(xh_ref.dtype)
    xh_ref[E:, :] = h.astype(xh_ref.dtype)

    b = b_ref[...]                                   # (3E, 1) f32

    # [[Wr_x Wr_h] [Wu_x Wu_h] [Wc_x 0]] @ [x; h] -> (3E, TN), f32 accumulate.
    g = jnp.dot(wxh_ref[...], xh_ref[...], preferred_element_type=jnp.float32)

    # r_t = sigmoid(Wr_x@x + Wr_h@h + br)
    r = jax.nn.sigmoid(g[:E] + b[:E])
    # u_t = sigmoid(Wu_x@x + Wu_h@h + bu)
    u = jax.nn.sigmoid(g[E:2 * E] + b[E:2 * E])
    # c_t = tanh(Wc_x@x + Wc_h@(r*h) + bc)   (needs r -> separate small dot)
    c = jnp.tanh(
        g[2 * E:]
        + jnp.dot(wch_ref[...], (r * h).astype(wch_ref.dtype),
                  preferred_element_type=jnp.float32)
        + b[2 * E:]
    )
    # h_t = u*h + (1-u)*c  ==  c + u*(h - c)   (one fewer VPU op / element)
    out_ref[...] = (c + u * (h - c)).astype(out_ref.dtype)


def prepare_params(params, compute_dtype=jnp.float32):
    """One-time stacking of gate weights/biases (hoisted off the step path).

    compute_dtype: dtype of the MXU operands. Set jnp.bfloat16 on v6e/v7x for
    ~2-3x MXU throughput and half the weight DMA bytes (relax the tolerance to
    ~1e-3). Gate elementwise math stays f32 regardless.
    """
    E = params["Wr_x"].shape[0]
    zeros = jnp.zeros((E, E), dtype=params["Wc_x"].dtype)
    wxh = jnp.concatenate(
        [
            jnp.concatenate([params["Wr_x"], params["Wr_h"]], axis=1),
            jnp.concatenate([params["Wu_x"], params["Wu_h"]], axis=1),
            jnp.concatenate([params["Wc_x"], zeros], axis=1),
        ],
        axis=0,
    )                                                              # (3E, 2E)
    b = jnp.concatenate([params["br"], params["bu"], params["bc"]], axis=0)
    return {
        "wxh": wxh.astype(compute_dtype),          # fused projection weights
        "wch": params["Wc_h"].astype(compute_dtype),
        "b": b.astype(jnp.float32),                # (3E, 1), bias stays f32
    }


def _pick_col_tile(N):
    # Largest lane-dense tile that divides N (VMEM cost per block is only a
    # few E x tn f32 buffers since weights are resident). Otherwise a single
    # full-N block (block dim == full array dim is always legal) -> no pad.
    for tn in (2048, 1024, 512, 256, 128):
        if N % tn == 0:
            return tn
    return N


@jax.jit
def gru_cell_forward(prepared, features_t_0, hidden_state_t_1):
    E, N = features_t_0.shape
    assert hidden_state_t_1.shape == (E, N)
    assert E % 8 == 0, "sublane-aligned gate slices require E % 8 == 0"
    wxh, wch, b = prepared["wxh"], prepared["wch"], prepared["b"]

    tn = _pick_col_tile(N)
    grid = (N // tn,)

    # Weights/bias: constant index_map -> DMA'd once, VMEM-resident across
    # the column blocks. Resident bytes = ~7*E^2*itemsize; raise
    # vmem_limit_bytes if E is scaled toward ~1k on v7x (64 MiB VMEM).
    const = lambda arr: pl.BlockSpec(arr.shape, lambda j: (0,) * arr.ndim)
    col_block = pl.BlockSpec((E, tn), lambda j: (0, j))

    return pl.pallas_call(
        _gru_cell_kernel,
        out_shape=jax.ShapeDtypeStruct((E, N), features_t_0.dtype),
        grid=grid,
        in_specs=[
            const(wxh),   # fused [Wr|Wu|Wc] x/h-side weights (3E, 2E)
            const(wch),   # Wc_h (E, E)
            const(b),     # stacked biases (3E, 1)
            col_block,    # x
            col_block,    # h
        ],
        out_specs=col_block,
        scratch_shapes=[pltpu.VMEM((2 * E, tn), wxh.dtype)],  # [x; h] staging
        compiler_params=pltpu.CompilerParams(
            # Column blocks are independent -> megacore-splittable on v7x
            # whenever N // tn >= 2 (no-op otherwise).
            dimension_semantics=("parallel",),
        ),
    )(wxh, wch, b, features_t_0, hidden_state_t_1)


def init_params(key, E, dtype=jnp.float32):
    keys = jax.random.split(key, 9)
    names_shapes = [
        ("Wr_x", (E, E)), ("Wr_h", (E, E)), ("br", (E, 1)),
        ("Wu_x", (E, E)), ("Wu_h", (E, E)), ("bu", (E, 1)),
        ("Wc_x", (E, E)), ("Wc_h", (E, E)), ("bc", (E, 1)),
    ]
    return {
        name: jax.random.normal(k, shape, dtype=dtype)
        for k, (name, shape) in zip(keys, names_shapes)
    }


def gru_cell_ref(params, x, h):
    """Pure-JAX reference mirroring the PyTorch forward."""
    sig = jax.nn.sigmoid
    r = sig(params["Wr_x"] @ x + params["Wr_h"] @ h + params["br"])
    u = sig(params["Wu_x"] @ x + params["Wu_h"] @ h + params["bu"])
    c = jnp.tanh(params["Wc_x"] @ x + params["Wc_h"] @ (r * h) + params["bc"])
    return u * h + (1.0 - u) * c


if __name__ == "__main__":
    E = 32   # nodes_dim

    key = jax.random.PRNGKey(0)
    k_params, k_x, k_h, k_x2, k_h2 = jax.random.split(key, 5)

    params = init_params(k_params, E)
    prepared = prepare_params(params)          # one-time weight stacking

    # Case 1: the module's natural small shape (N=16 -> single full-N block).
    N = 16
    features_t_0 = jax.random.normal(k_x, (E, N), dtype=jnp.float32)
    hidden_state_t_1 = jax.random.normal(k_h, (E, N), dtype=jnp.float32)
    h_t_0 = jax.block_until_ready(
        gru_cell_forward(prepared, features_t_0, hidden_state_t_1))
    ref = gru_cell_ref(params, features_t_0, hidden_state_t_1)
    assert h_t_0.shape == (E, N)
    assert jnp.allclose(h_t_0, ref, atol=1e-5, rtol=1e-5)

    # Case 2: lane-dense multi-block path (N=384 -> tn=128, grid=(3,)).
    N2 = 384
    x2 = jax.random.normal(k_x2, (E, N2), dtype=jnp.float32)
    h2 = jax.random.normal(k_h2, (E, N2), dtype=jnp.float32)
    out2 = jax.block_until_ready(gru_cell_forward(prepared, x2, h2))
    ref2 = gru_cell_ref(params, x2, h2)
    assert jnp.allclose(out2, ref2, atol=1e-5, rtol=1e-5)

    print("KERNEL_OK")
</pallas_src>

<mosaic_0001>
module attributes {stable_mosaic.version = 11 : i64} {
  func.func @_gru_cell_kernel(%arg0: i32, %arg1: memref<96x64xf32, #tpu.memory_space<vmem>>, %arg2: memref<32x32xf32, #tpu.memory_space<vmem>>, %arg3: memref<96x1xf32, #tpu.memory_space<vmem>>, %arg4: memref<32x16xf32, #tpu.memory_space<vmem>>, %arg5: memref<32x16xf32, #tpu.memory_space<vmem>>, %arg6: memref<32x16xf32, #tpu.memory_space<vmem>>, %arg7: memref<64x16xf32, #tpu.memory_space<vmem>>) attributes {dimension_semantics = [#tpu.dimension_semantics<parallel>], iteration_bounds = array<i64: 1>, scalar_prefetch = 0 : i64, scratch_operands = 1 : i64, tpu.core_type = #tpu.core_type<tc>, window_params = [{pipeline_mode = #tpu.pipeline_mode<synchronous>, transform_indices = @transform_0, window_bounds = array<i64: 96, 64>}, {pipeline_mode = #tpu.pipeline_mode<synchronous>, transform_indices = @transform_1, window_bounds = array<i64: 32, 32>}, {pipeline_mode = #tpu.pipeline_mode<synchronous>, transform_indices = @transform_2, window_bounds = array<i64: 96, 1>}, {transform_indices = @transform_3, window_bounds = array<i64: 32, 16>}, {transform_indices = @transform_4, window_bounds = array<i64: 32, 16>}, {transform_indices = @transform_5, window_bounds = array<i64: 32, 16>}]} {
    %c0 = arith.constant 0 : index
    %c0_0 = arith.constant 0 : index
    %0 = vector.load %arg5[%c0, %c0_0] : memref<32x16xf32, #tpu.memory_space<vmem>>, vector<32x16xf32>
    %c0_1 = arith.constant 0 : index
    %c0_2 = arith.constant 0 : index
    %1 = vector.load %arg4[%c0_1, %c0_2] : memref<32x16xf32, #tpu.memory_space<vmem>>, vector<32x16xf32>
    %c0_3 = arith.constant 0 : index
    %c0_4 = arith.constant 0 : index
    %2 = vector.load %arg7[%c0_3, %c0_4] : memref<64x16xf32, #tpu.memory_space<vmem>>, vector<32x16xf32>
    tpu.vector_store %arg7[%c0_3, %c0_4], %1 {strides = array<i32>} : memref<64x16xf32, #tpu.memory_space<vmem>>, vector<32x16xf32>,
    %c32 = arith.constant 32 : index
    %c0_5 = arith.constant 0 : index
    %3 = vector.load %arg7[%c32, %c0_5] : memref<64x16xf32, #tpu.memory_space<vmem>>, vector<32x16xf32>
    tpu.vector_store %arg7[%c32, %c0_5], %0 {strides = array<i32>} : memref<64x16xf32, #tpu.memory_space<vmem>>, vector<32x16xf32>,
    %c0_6 = arith.constant 0 : index
    %c0_7 = arith.constant 0 : index
    %4 = vector.load %arg3[%c0_6, %c0_7] : memref<96x1xf32, #tpu.memory_space<vmem>>, vector<96x1xf32>
    %c0_8 = arith.constant 0 : index
    %c0_9 = arith.constant 0 : index
    %5 = vector.load %arg1[%c0_8, %c0_9] : memref<96x64xf32, #tpu.memory_space<vmem>>, vector<96x64xf32>
    %c0_10 = arith.constant 0 : index
    %c0_11 = arith.constant 0 : index
    %6 = vector.load %arg7[%c0_10, %c0_11] : memref<64x16xf32, #tpu.memory_space<vmem>>, vector<64x16xf32>
    %cst = arith.constant dense<0.000000e+00> : vector<96x16xf32>
    %7 = tpu.matmul %5, %6, %cst {dimension_numbers = #tpu.dot_dimension_numbers<[1], [0], [0], [1], [0, 0, 1, 1], [], []>} : vector<96x64xf32>, vector<64x16xf32>, vector<96x16xf32> -> vector<96x16xf32>
    %8 = vector.extract_strided_slice %7 {offsets = [0, 0], sizes = [32, 16], strides = [1, 1]} : vector<96x16xf32> to vector<32x16xf32>
    %9 = vector.extract_strided_slice %4 {offsets = [0, 0], sizes = [32, 1], strides = [1, 1]} : vector<96x1xf32> to vector<32x1xf32>
    %10 = vector.broadcast %9 : vector<32x1xf32> to vector<32x16xf32>
    %11 = arith.addf %8, %10 : vector<32x16xf32>
    %12 = arith.negf %11 : vector<32x16xf32>
    %13 = math.exp %12 : vector<32x16xf32>
    %cst_12 = arith.constant 1.000000e+00 : f32
    %14 = vector.broadcast %cst_12 : f32 to vector<32x16xf32>
    %15 = arith.addf %14, %13 : vector<32x16xf32>
    %16 = arith.divf %14, %15 : vector<32x16xf32>
    %17 = vector.extract_strided_slice %7 {offsets = [32, 0], sizes = [32, 16], strides = [1, 1]} : vector<96x16xf32> to vector<32x16xf32>
    %18 = vector.extract_strided_slice %4 {offsets = [32, 0], sizes = [32, 1], strides = [1, 1]} : vector<96x1xf32> to vector<32x1xf32>
    %19 = vector.broadcast %18 : vector<32x1xf32> to vector<32x16xf32>
    %20 = arith.addf %17, %19 : vector<32x16xf32>
    %21 = arith.negf %20 : vector<32x16xf32>
    %22 = math.exp %21 : vector<32x16xf32>
    %cst_13 = arith.constant 1.000000e+00 : f32
    %23 = vector.broadcast %cst_13 : f32 to vector<32x16xf32>
    %24 = arith.addf %23, %22 : vector<32x16xf32>
    %25 = arith.divf %23, %24 : vector<32x16xf32>
    %26 = vector.extract_strided_slice %7 {offsets = [64, 0], sizes = [32, 16], strides = [1, 1]} : vector<96x16xf32> to vector<32x16xf32>
    %c0_14 = arith.constant 0 : index
    %c0_15 = arith.constant 0 : index
    %27 = vector.load %arg2[%c0_14, %c0_15] : memref<32x32xf32, #tpu.memory_space<vmem>>, vector<32x32xf32>
    %28 = arith.mulf %16, %0 : vector<32x16xf32>
    %cst_16 = arith.constant dense<0.000000e+00> : vector<32x16xf32>
    %29 = tpu.matmul %27, %28, %cst_16 {dimension_numbers = #tpu.dot_dimension_numbers<[1], [0], [0], [1], [0, 0, 1, 1], [], []>} : vector<32x32xf32>, vector<32x16xf32>, vector<32x16xf32> -> vector<32x16xf32>
    %30 = arith.addf %26, %29 : vector<32x16xf32>
    %31 = vector.extract_strided_slice %4 {offsets = [64, 0], sizes = [32, 1], strides = [1, 1]} : vector<96x1xf32> to vector<32x1xf32>
    %32 = vector.broadcast %31 : vector<32x1xf32> to vector<32x16xf32>
    %33 = arith.addf %30, %32 : vector<32x16xf32>
    %34 = math.tanh %33 : vector<32x16xf32>
    %35 = arith.subf %0, %34 : vector<32x16xf32>
    %36 = arith.mulf %25, %35 : vector<32x16xf32>
    %37 = arith.addf %34, %36 : vector<32x16xf32>
    %c0_17 = arith.constant 0 : index
    %c0_18 = arith.constant 0 : index
    %38 = vector.load %arg6[%c0_17, %c0_18] : memref<32x16xf32, #tpu.memory_space<vmem>>, vector<32x16xf32>
    tpu.vector_store %arg6[%c0_17, %c0_18], %37 {strides = array<i32>} : memref<32x16xf32, #tpu.memory_space<vmem>>, vector<32x16xf32>,
    return
  }
  func.func @transform_0(%arg0: i32) -> (i32, i32) {
    %c0_i32 = arith.constant 0 : i32
    %c0_i32_0 = arith.constant 0 : i32
    %c0_i32_1 = arith.constant 0 : i32
    return %c0_i32, %c0_i32_0 : i32, i32
  }
  func.func @transform_1(%arg0: i32) -> (i32, i32) {
    %c0_i32 = arith.constant 0 : i32
    %c0_i32_0 = arith.constant 0 : i32
    %c0_i32_1 = arith.constant 0 : i32
    return %c0_i32, %c0_i32_0 : i32, i32
  }
  func.func @transform_2(%arg0: i32) -> (i32, i32) {
    %c0_i32 = arith.constant 0 : i32
    %c0_i32_0 = arith.constant 0 : i32
    %c0_i32_1 = arith.constant 0 : i32
    return %c0_i32, %c0_i32_0 : i32, i32
  }
  func.func @transform_3(%arg0: i32) -> (i32, i32) {
    %c0_i32 = arith.constant 0 : i32
    %c0_i32_0 = arith.constant 0 : i32
    return %c0_i32, %arg0 : i32, i32
  }
  func.func @transform_4(%arg0: i32) -> (i32, i32) {
    %c0_i32 = arith.constant 0 : i32
    %c0_i32_0 = arith.constant 0 : i32
    return %c0_i32, %arg0 : i32, i32
  }
  func.func @transform_5(%arg0: i32) -> (i32, i32) {
    %c0_i32 = arith.constant 0 : i32
    %c0_i32_0 = arith.constant 0 : i32
    return %c0_i32, %arg0 : i32, i32
  }
}

</mosaic_0001>

<llo_original>
// kernel: gru_cell_forward.1
$region0: #{gru_cell_forward.1}
  #allocation0 [shape = 'u32[]', space=smem, size = 0x4, offset = 0x4, fixed_abs, tag = 'smem constant byte address 0x4 - core index']
  #allocation1 [shape = 'u32[144,128]{1,0:T(1,128)}', space=vmem, size = 0x12000, scoped, tag = 'internal scratch']
  #allocation2 [shape = 'f32[64,16]{1,0:T(8,128)}', space=vmem, size = 0x8000, scoped, tag = 'scratch operand']
  %s0 = inlined_call_operand.vmem [shape: f32[96,64], index: 0, kind: input, shape index: {}]
  %s1 = inlined_call_operand.vmem [shape: f32[32,32], index: 1, kind: input, shape index: {}]
  %s2 = inlined_call_operand.vmem [shape: f32[96,1], index: 2, kind: input, shape index: {}]
  %s3 = inlined_call_operand.vmem [shape: f32[32,16], index: 3, kind: input, shape index: {}]
  %s4 = inlined_call_operand.vmem [shape: f32[32,16], index: 4, kind: input, shape index: {}]
  %s5 = inlined_call_operand.vmem [shape: f32[32,16], index: 5, kind: output, shape index: {}]
  %s6 = sld [smem:[#allocation0]]
  $region30: #{gru_cell_forward.1} parent=0
    _
  %s8 = ssub.s32 1, %s6
  %s9 = scalar_select 0, %s8, %s6
  // Predicated region
  $region2: #{gru_cell_forward.1} parent=0 // pred_check
    _
  $region3: #{gru_cell_forward.1} parent=0 // pred_check_branch
    %11 = sbr.rel (0) target = $region5
  $region4: #{gru_cell_forward.1} parent=0 // pred_region
    _
  $region5: #{gru_cell_forward.1} parent=0 // pred_fallthru
    _
  // Predicated region
  $region6: #{gru_cell_forward.1} parent=0 // pred_check
    _
  $region7: #{gru_cell_forward.1} parent=0 // pred_check_branch
    %13 = sbr.rel (0) target = $region9
  $region8: #{gru_cell_forward.1} parent=0 // pred_region
    _
  $region9: #{gru_cell_forward.1} parent=0 // pred_fallthru
    _
  // Predicated region
  $region10: #{gru_cell_forward.1} parent=0 // pred_check
    _
  $region11: #{gru_cell_forward.1} parent=0 // pred_check_branch
    %15 = sbr.rel (0) target = $region13
  $region12: #{gru_cell_forward.1} parent=0 // pred_region
    _
  $region13: #{gru_cell_forward.1} parent=0 // pred_fallthru
    _
  // Predicated region
  $region14: #{gru_cell_forward.1} parent=0 // pred_check
    _
  $region15: #{gru_cell_forward.1} parent=0 // pred_check_branch
    %17 = sbr.rel (0) target = $region17
  $region16: #{gru_cell_forward.1} parent=0 // pred_region
    _
  $region17: #{gru_cell_forward.1} parent=0 // pred_fallthru
    _
  // Predicated region
  $region18: #{gru_cell_forward.1} parent=0 // pred_check
    _
  $region19: #{gru_cell_forward.1} parent=0 // pred_check_branch
    %19 = sbr.rel (0) target = $region21
  $region20: #{gru_cell_forward.1} parent=0 // pred_region
    _
  $region21: #{gru_cell_forward.1} parent=0 // pred_fallthru
    _
  %v20 = vld [vmem:[%s4] sm:$0xff]
  %v21 = vld [vmem:[%s4 + $0x8] sm:$0xff]
  %v22 = vld [vmem:[%s4 + $0x10] sm:$0xff]
  %v23 = vld [vmem:[%s4 + $0x18] sm:$0xff]
  %v24 = vld [vmem:[%s3] sm:$0xff]
  %v25 = vld [vmem:[%s3 + $0x8] sm:$0xff]
  %v26 = vld [vmem:[%s3 + $0x10] sm:$0xff]
  %v27 = vld [vmem:[%s3 + $0x18] sm:$0xff]
  %vm28 = vcmask 130048
  %29 = vst.msk [vmem:[#allocation2] sm:$0xff] %vm28, %v24
  %30 = vst.msk [vmem:[#allocation2 + $0x8] sm:$0xff] %vm28, %v25
  %31 = vst.msk [vmem:[#allocation2 + $0x10] sm:$0xff] %vm28, %v26
  %32 = vst.msk [vmem:[#allocation2 + $0x18] sm:$0xff] %vm28, %v27
  %33 = vst.msk [vmem:[#allocation2 + $0x20] sm:$0xff] %vm28, %v20
  %34 = vst.msk [vmem:[#allocation2 + $0x28] sm:$0xff] %vm28, %v21
  %35 = vst.msk [vmem:[#allocation2 + $0x30] sm:$0xff] %vm28, %v22
  %36 = vst.msk [vmem:[#allocation2 + $0x38] sm:$0xff] %vm28, %v23
  %v37 = vld [vmem:[%s2] sm:$0xff]
  %v38 = vld [vmem:[%s2 + $0x8] sm:$0xff]
  %v39 = vld [vmem:[%s2 + $0x10] sm:$0xff]
  %v40 = vld [vmem:[%s2 + $0x18] sm:$0xff]
  %v41 = vld [vmem:[%s2 + $0x20] sm:$0xff]
  %v42 = vld [vmem:[%s2 + $0x28] sm:$0xff]
  %v43 = vld [vmem:[%s2 + $0x30] sm:$0xff]
  %v44 = vld [vmem:[%s2 + $0x38] sm:$0xff]
  %v45 = vld [vmem:[%s2 + $0x40] sm:$0xff]
  %v46 = vld [vmem:[%s2 + $0x48] sm:$0xff]
  %v47 = vld [vmem:[%s2 + $0x50] sm:$0xff]
  %v48 = vld [vmem:[%s2 + $0x58] sm:$0xff]
  %v49 = vld [vmem:[%s0] sm:$0xff]
  %v50 = vld [vmem:[%s0 + $0x8] sm:$0xff]
  %v51 = vld [vmem:[%s0 + $0x10] sm:$0xff]
  %v52 = vld [vmem:[%s0 + $0x18] sm:$0xff]
  %v53 = vld [vmem:[%s0 + $0x20] sm:$0xff]
  %v54 = vld [vmem:[%s0 + $0x28] sm:$0xff]
  %v55 = vld [vmem:[%s0 + $0x30] sm:$0xff]
  %v56 = vld [vmem:[%s0 + $0x38] sm:$0xff]
  %v57 = vld [vmem:[%s0 + $0x40] sm:$0xff]
  %v58 = vld [vmem:[%s0 + $0x48] sm:$0xff]
  %v59 = vld [vmem:[%s0 + $0x50] sm:$0xff]
  %v60 = vld [vmem:[%s0 + $0x58] sm:$0xff]
  %v61 = vld [vmem:[#allocation2] sm:$0xff]
  %v62 = vld [vmem:[#allocation2 + $0x8] sm:$0xff]
  %v63 = vld [vmem:[#allocation2 + $0x10] sm:$0xff]
  %v64 = vld [vmem:[#allocation2 + $0x18] sm:$0xff]
  %v65 = vld [vmem:[#allocation2 + $0x20] sm:$0xff]
  %v66 = vld [vmem:[#allocation2 + $0x28] sm:$0xff]
  %v67 = vld [vmem:[#allocation2 + $0x30] sm:$0xff]
  %v68 = vld [vmem:[#allocation2 + $0x38] sm:$0xff]
  %vm69 = vcmask 523264
  %v71 = vsel %vm69, %v49, 0
  %v74 = vsel %vm69, %v50, 0
  %v77 = vsel %vm69, %v51, 0
  %v80 = vsel %vm69, %v52, 0
  %v83 = vsel %vm69, %v53, 0
  %v86 = vsel %vm69, %v54, 0
  %v89 = vsel %vm69, %v55, 0
  %v92 = vsel %vm69, %v56, 0
  %v95 = vsel %vm69, %v57, 0
  %v98 = vsel %vm69, %v58, 0
  %v101 = vsel %vm69, %v59, 0
  %v104 = vsel %vm69, %v60, 0
  %106 = vmatprep.subr.mxu0 0.0
  %107 = vmatpush1.msra.mxu0 0.0
  %108 = vmatprep.subr.mxu0 0.0
  %109 = vmatpush1.msra.mxu0 0.0
  %110 = vmatprep.subr.mxu0 0.0
  %111 = vmatpush1.msra.mxu0 0.0
  %112 = vmatprep.subr.mxu0 0.0
  %113 = vmatpush1.msra.mxu0 0.0
  %114 = vmatprep.subr.mxu0 0.0
  %115 = vmatpush1.msra.mxu0 0.0
  %116 = vmatprep.subr.mxu0 0.0
  %117 = vmatpush1.msra.mxu0 0.0
  %118 = vmatprep.subr.mxu0 0.0
  %119 = vmatpush1.msra.mxu0 0.0
  %120 = vmatprep.subr.mxu0 0.0
  %121 = vmatpush1.msra.mxu0 0.0
  %122 = vmatprep.subr.mxu0 0.0
  %123 = vmatpush1.msra.mxu0 %v68
  %124 = vmatprep.subr.mxu0 0.0
  %125 = vmatpush1.msra.mxu0 %v67
  %126 = vmatprep.subr.mxu0 0.0
  %127 = vmatpush1.msra.mxu0 %v66
  %128 = vmatprep.subr.mxu0 0.0
  %129 = vmatpush1.msra.mxu0 %v65
  %130 = vmatprep.subr.mxu0 0.0
  %131 = vmatpush1.msra.mxu0 %v64
  %132 = vmatprep.subr.mxu0 0.0
  %133 = vmatpush1.msra.mxu0 %v63
  %134 = vmatprep.subr.mxu0 0.0
  %135 = vmatpush1.msra.mxu0 %v62
  %136 = vmatprep.subr.mxu0 0.0
  %137 = vmatpush1.msra.mxu0 %v61
  %138 = vmatprep.subr.mxu0 0.0
  %139 = vmatpush2.msra.mxu0 0.0
  %140 = vmatprep.subr.mxu0 0.0
  %141 = vmatpush2.msra.mxu0 0.0
  %142 = vmatprep.subr.mxu0 0.0
  %143 = vmatpush2.msra.mxu0 0.0
  %144 = vmatprep.subr.mxu0 0.0
  %145 = vmatpush2.msra.mxu0 0.0
  %146 = vmatprep.subr.mxu0 0.0
  %147 = vmatpush2.msra.mxu0 0.0
  %148 = vmatprep.subr.mxu0 0.0
  %149 = vmatpush2.msra.mxu0 0.0
  %150 = vmatprep.subr.mxu0 0.0
  %151 = vmatpush2.msra.mxu0 0.0
  %152 = vmatprep.subr.mxu0 0.0
  %153 = vmatpush2.msra.mxu0 0.0
  %154 = vmatprep.subr.mxu0 0.0
  %155 = vmatpush2.msra.mxu0 0.0
  %156 = vmatprep.subr.mxu0 0.0
  %157 = vmatpush2.msra.mxu0 0.0
  %158 = vmatprep.subr.mxu0 0.0
  %159 = vmatpush2.msra.mxu0 0.0
  %160 = vmatprep.subr.mxu0 0.0
  %161 = vmatpush2.msra.mxu0 0.0
  %162 = vmatprep.subr.mxu0 0.0
  %163 = vmatpush2.msra.mxu0 0.0
  %164 = vmatprep.subr.mxu0 0.0
  %165 = vmatpush2.msra.mxu0 0.0
  %166 = vmatprep.subr.mxu0 0.0
  %167 = vmatpush2.msra.mxu0 0.0
  %168 = vmatprep.subr.mxu0 0.0
  %169 = vmatpush2.msra.mxu0 0.0
  %170 = vmatprep.mubr.f32.mxu0 0.0
  %171 = vmatmul.mubr.f32.gmra.mxu0 %v71
  %v172 = vpop.f32.mrf.mxu0
  %v173 = vadd.f32 0.0, %v172
  %v174 = vpop.f32.mrf.mxu0
  %175 = vmatprep.mubr.f32.mxu0 0.0
  %176 = vmatmul.mubr.f32.gmra.mxu0 %v74
  %v177 = vpop.f32.mrf.mxu0
  %v178 = vadd.f32 0.0, %v177
  %v179 = vpop.f32.mrf.mxu0
  %180 = vmatprep.mubr.f32.mxu0 0.0
  %181 = vmatmul.mubr.f32.gmra.mxu0 %v77
  %v182 = vpop.f32.mrf.mxu0
  %v183 = vadd.f32 0.0, %v182
  %v184 = vpop.f32.mrf.mxu0
  %185 = vmatprep.mubr.f32.mxu0 0.0
  %186 = vmatmul.mubr.f32.gmra.mxu0 %v80
  %v187 = vpop.f32.mrf.mxu0
  %v188 = vadd.f32 0.0, %v187
  %v189 = vpop.f32.mrf.mxu0
  %190 = vmatprep.mubr.f32.mxu0 0.0
  %191 = vmatmul.mubr.f32.gmra.mxu0 %v83
  %v192 = vpop.f32.mrf.mxu0
  %v193 = vadd.f32 0.0, %v192
  %v194 = vpop.f32.mrf.mxu0
  %195 = vmatprep.mubr.f32.mxu0 0.0
  %196 = vmatmul.mubr.f32.gmra.mxu0 %v86
  %v197 = vpop.f32.mrf.mxu0
  %v198 = vadd.f32 0.0, %v197
  %v199 = vpop.f32.mrf.mxu0
  %200 = vmatprep.mubr.f32.mxu0 0.0
  %201 = vmatmul.mubr.f32.gmra.mxu0 %v89
  %v202 = vpop.f32.mrf.mxu0
  %v203 = vadd.f32 0.0, %v202
  %v204 = vpop.f32.mrf.mxu0
  %205 = vmatprep.mubr.f32.mxu0 0.0
  %206 = vmatmul.mubr.f32.gmra.mxu0 %v92
  %v207 = vpop.f32.mrf.mxu0
  %v208 = vadd.f32 0.0, %v207
  %v209 = vpop.f32.mrf.mxu0
  %210 = vmatprep.mubr.f32.mxu0 0.0
  %211 = vmatmul.mubr.f32.gmra.mxu0 %v95
  %v212 = vpop.f32.mrf.mxu0
  %v213 = vadd.f32 0.0, %v212
  %v214 = vpop.f32.mrf.mxu0
  %215 = vmatprep.mubr.f32.mxu0 0.0
  %216 = vmatmul.mubr.f32.gmra.mxu0 %v98
  %v217 = vpop.f32.mrf.mxu0
  %v218 = vadd.f32 0.0, %v217
  %v219 = vpop.f32.mrf.mxu0
  %220 = vmatprep.mubr.f32.mxu0 0.0
  %221 = vmatmul.mubr.f32.gmra.mxu0 %v101
  %v222 = vpop.f32.mrf.mxu0
  %v223 = vadd.f32 0.0, %v222
  %v224 = vpop.f32.mrf.mxu0
  %225 = vmatprep.mubr.f32.mxu0 0.0
  %226 = vmatmul.mubr.f32.gmra.mxu0 %v104
  %v227 = vpop.f32.mrf.mxu0
  %v228 = vadd.f32 0.0, %v227
  %v229 = vpop.f32.mrf.mxu0
  %230 = vdwg.mxu0
  %232 = vset.pattern.permute.xlu0 0
  %233 = vperm.xlu0 %232, %v37
  %v234 = vpop.permute.xlu0 %233
  %237 = vset.pattern.permute.xlu0 0
  %238 = vperm.xlu0 %237, %v38
  %v239 = vpop.permute.xlu0 %238
  %242 = vset.pattern.permute.xlu0 0
  %243 = vperm.xlu0 %242, %v39
  %v244 = vpop.permute.xlu0 %243
  %247 = vset.pattern.permute.xlu0 0
  %248 = vperm.xlu0 %247, %v40
  %v249 = vpop.permute.xlu0 %248
  %v251 = vadd.f32 %v173, %v234
  %v252 = vadd.f32 %v178, %v239
  %v253 = vadd.f32 %v183, %v244
  %v254 = vadd.f32 %v188, %v249
  %v255 = vxor.u32 %v251, 2147483648
  %v256 = vxor.u32 %v252, 2147483648
  %v257 = vxor.u32 %v253, 2147483648
  %v258 = vxor.u32 %v254, 2147483648
  %v259 = vmul.f32 %v255, 1.442695
  %v260 = vpow.pop %v259
  %v261 = vmul.f32 %v256, 1.442695
  %v262 = vpow.pop %v261
  %v263 = vmul.f32 %v257, 1.442695
  %v264 = vpow.pop %v263
  %v265 = vmul.f32 %v258, 1.442695
  %v266 = vpow.pop %v265
  %v267 = vadd.f32 %v260, 1.0
  %v268 = vadd.f32 %v262, 1.0
  %v269 = vadd.f32 %v264, 1.0
  %v270 = vadd.f32 %v266, 1.0
  %v271 = vrcp.pop %v267
  %v272 = vmul.f32 1.0, %v271
  %v273 = vrcp.pop %v268
  %v274 = vmul.f32 1.0, %v273
  %v275 = vrcp.pop %v269
  %v276 = vmul.f32 1.0, %v275
  %v277 = vrcp.pop %v270
  %v278 = vmul.f32 1.0, %v277
  %280 = vset.pattern.permute.xlu0 0
  %281 = vperm.xlu0 %280, %v41
  %v282 = vpop.permute.xlu0 %281
  %285 = vset.pattern.permute.xlu0 0
  %286 = vperm.xlu0 %285, %v42
  %v287 = vpop.permute.xlu0 %286
  %290 = vset.pattern.permute.xlu0 0
  %291 = vperm.xlu0 %290, %v43
  %v292 = vpop.permute.xlu0 %291
  %295 = vset.pattern.permute.xlu0 0
  %296 = vperm.xlu0 %295, %v44
  %v297 = vpop.permute.xlu0 %296
  %v299 = vadd.f32 %v193, %v282
  %v300 = vadd.f32 %v198, %v287
  %v301 = vadd.f32 %v203, %v292
  %v302 = vadd.f32 %v208, %v297
  %v303 = vxor.u32 %v299, 2147483648
  %v304 = vxor.u32 %v300, 2147483648
  %v305 = vxor.u32 %v301, 2147483648
  %v306 = vxor.u32 %v302, 2147483648
  %v307 = vmul.f32 %v303, 1.442695
  %v308 = vpow.pop %v307
  %v309 = vmul.f32 %v304, 1.442695
  %v310 = vpow.pop %v309
  %v311 = vmul.f32 %v305, 1.442695
  %v312 = vpow.pop %v311
  %v313 = vmul.f32 %v306, 1.442695
  %v314 = vpow.pop %v313
  %v315 = vadd.f32 %v308, 1.0
  %v316 = vadd.f32 %v310, 1.0
  %v317 = vadd.f32 %v312, 1.0
  %v318 = vadd.f32 %v314, 1.0
  %v319 = vrcp.pop %v315
  %v320 = vmul.f32 1.0, %v319
  %v321 = vrcp.pop %v316
  %v322 = vmul.f32 1.0, %v321
  %v323 = vrcp.pop %v317
  %v324 = vmul.f32 1.0, %v323
  %v325 = vrcp.pop %v318
  %v326 = vmul.f32 1.0, %v325
  %v327 = vld [vmem:[%s1] sm:$0xff]
  %v328 = vld [vmem:[%s1 + $0x8] sm:$0xff]
  %v329 = vld [vmem:[%s1 + $0x10] sm:$0xff]
  %v330 = vld [vmem:[%s1 + $0x18] sm:$0xff]
  %v331 = vmul.f32 %v272, %v20
  %v332 = vmul.f32 %v274, %v21
  %v333 = vmul.f32 %v276, %v22
  %v334 = vmul.f32 %v278, %v23
  %vm335 = vcmask 261120
  %v337 = vsel %vm335, %v327, 0
  %v340 = vsel %vm335, %v328, 0
  %v343 = vsel %vm335, %v329, 0
  %v346 = vsel %vm335, %v330, 0
  %348 = vmatprep.subr.mxu0 0.0
  %349 = vmatpush1.msra.mxu0 0.0
  %350 = vmatprep.subr.mxu0 0.0
  %351 = vmatpush1.msra.mxu0 0.0
  %352 = vmatprep.subr.mxu0 0.0
  %353 = vmatpush1.msra.mxu0 0.0
  %354 = vmatprep.subr.mxu0 0.0
  %355 = vmatpush1.msra.mxu0 0.0
  %356 = vmatprep.subr.mxu0 0.0
  %357 = vmatpush1.msra.mxu0 0.0
  %358 = vmatprep.subr.mxu0 0.0
  %359 = vmatpush1.msra.mxu0 0.0
  %360 = vmatprep.subr.mxu0 0.0
  %361 = vmatpush1.msra.mxu0 0.0
  %362 = vmatprep.subr.mxu0 0.0
  %363 = vmatpush1.msra.mxu0 0.0
  %364 = vmatprep.subr.mxu0 0.0
  %365 = vmatpush1.msra.mxu0 0.0
  %366 = vmatprep.subr.mxu0 0.0
  %367 = vmatpush1.msra.mxu0 0.0
  %368 = vmatprep.subr.mxu0 0.0
  %369 = vmatpush1.msra.mxu0 0.0
  %370 = vmatprep.subr.mxu0 0.0
  %371 = vmatpush1.msra.mxu0 0.0
  %372 = vmatprep.subr.mxu0 0.0
  %373 = vmatpush1.msra.mxu0 %v334
  %374 = vmatprep.subr.mxu0 0.0
  %375 = vmatpush1.msra.mxu0 %v333
  %376 = vmatprep.subr.mxu0 0.0
  %377 = vmatpush1.msra.mxu0 %v332
  %378 = vmatprep.subr.mxu0 0.0
  %379 = vmatpush1.msra.mxu0 %v331
  %380 = vmatprep.subr.mxu0 0.0
  %381 = vmatpush2.msra.mxu0 0.0
  %382 = vmatprep.subr.mxu0 0.0
  %383 = vmatpush2.msra.mxu0 0.0
  %384 = vmatprep.subr.mxu0 0.0
  %385 = vmatpush2.msra.mxu0 0.0
  %386 = vmatprep.subr.mxu0 0.0
  %387 = vmatpush2.msra.mxu0 0.0
  %388 = vmatprep.subr.mxu0 0.0
  %389 = vmatpush2.msra.mxu0 0.0
  %390 = vmatprep.subr.mxu0 0.0
  %391 = vmatpush2.msra.mxu0 0.0
  %392 = vmatprep.subr.mxu0 0.0
  %393 = vmatpush2.msra.mxu0 0.0
  %394 = vmatprep.subr.mxu0 0.0
  %395 = vmatpush2.msra.mxu0 0.0
  %396 = vmatprep.subr.mxu0 0.0
  %397 = vmatpush2.msra.mxu0 0.0
  %398 = vmatprep.subr.mxu0 0.0
  %399 = vmatpush2.msra.mxu0 0.0
  %400 = vmatprep.subr.mxu0 0.0
  %401 = vmatpush2.msra.mxu0 0.0
  %402 = vmatprep.subr.mxu0 0.0
  %403 = vmatpush2.msra.mxu0 0.0
  %404 = vmatprep.subr.mxu0 0.0
  %405 = vmatpush2.msra.mxu0 0.0
  %406 = vmatprep.subr.mxu0 0.0
  %407 = vmatpush2.msra.mxu0 0.0
  %408 = vmatprep.subr.mxu0 0.0
  %409 = vmatpush2.msra.mxu0 0.0
  %410 = vmatprep.subr.mxu0 0.0
  %411 = vmatpush2.msra.mxu0 0.0
  %412 = vmatprep.mubr.f32.mxu0 0.0
  %413 = vmatmul.mubr.f32.gmra.mxu0 %v337
  %v414 = vpop.f32.mrf.mxu0
  %v415 = vadd.f32 0.0, %v414
  %v416 = vpop.f32.mrf.mxu0
  %417 = vmatprep.mubr.f32.mxu0 0.0
  %418 = vmatmul.mubr.f32.gmra.mxu0 %v340
  %v419 = vpop.f32.mrf.mxu0
  %v420 = vadd.f32 0.0, %v419
  %v421 = vpop.f32.mrf.mxu0
  %422 = vmatprep.mubr.f32.mxu0 0.0
  %423 = vmatmul.mubr.f32.gmra.mxu0 %v343
  %v424 = vpop.f32.mrf.mxu0
  %v425 = vadd.f32 0.0, %v424
  %v426 = vpop.f32.mrf.mxu0
  %427 = vmatprep.mubr.f32.mxu0 0.0
  %428 = vmatmul.mubr.f32.gmra.mxu0 %v346
  %v429 = vpop.f32.mrf.mxu0
  %v430 = vadd.f32 0.0, %v429
  %v431 = vpop.f32.mrf.mxu0
  %432 = vdwg.mxu0
  %v433 = vadd.f32 %v213, %v415
  %v434 = vadd.f32 %v218, %v420
  %v435 = vadd.f32 %v223, %v425
  %v436 = vadd.f32 %v228, %v430
  %438 = vset.pattern.permute.xlu0 0
  %439 = vperm.xlu0 %438, %v45
  %v440 = vpop.permute.xlu0 %439
  %443 = vset.pattern.permute.xlu0 0
  %444 = vperm.xlu0 %443, %v46
  %v445 = vpop.permute.xlu0 %444
  %448 = vset.pattern.permute.xlu0 0
  %449 = vperm.xlu0 %448, %v47
  %v450 = vpop.permute.xlu0 %449
  %453 = vset.pattern.permute.xlu0 0
  %454 = vperm.xlu0 %453, %v48
  %v455 = vpop.permute.xlu0 %454
  %v457 = vadd.f32 %v433, %v440
  %v458 = vadd.f32 %v434, %v445
  %v459 = vadd.f32 %v435, %v450
  %v460 = vadd.f32 %v436, %v455
  %v461 = vtanh.pop %v457
  %v462 = vtanh.pop %v458
  %v463 = vtanh.pop %v459
  %v464 = vtanh.pop %v460
  %v465 = vsub.f32 %v20, %v461
  %v466 = vsub.f32 %v21, %v462
  %v467 = vsub.f32 %v22, %v463
  %v468 = vsub.f32 %v23, %v464
  %v469 = vmul.f32 %v320, %v465
  %v470 = vmul.f32 %v322, %v466
  %v471 = vmul.f32 %v324, %v467
  %v472 = vmul.f32 %v326, %v468
  %v473 = vadd.f32 %v461, %v469
  %v474 = vadd.f32 %v462, %v470
  %v475 = vadd.f32 %v463, %v471
  %v476 = vadd.f32 %v464, %v472
  %477 = vst.msk [vmem:[%s5] sm:$0xff] %vm28, %v473
  %478 = vst.msk [vmem:[%s5 + $0x8] sm:$0xff] %vm28, %v474
  %479 = vst.msk [vmem:[%s5 + $0x10] sm:$0xff] %vm28, %v475
  %480 = vst.msk [vmem:[%s5 + $0x18] sm:$0xff] %vm28, %v476
  // Predicated region
  $region22: #{gru_cell_forward.1} parent=0 // pred_check
    _
  $region23: #{gru_cell_forward.1} parent=0 // pred_check_branch
    %482 = sbr.rel (0) target = $region25
  $region24: #{gru_cell_forward.1} parent=0 // pred_region
    _
  $region25: #{gru_cell_forward.1} parent=0 // pred_fallthru
    _
  // Predicated region
  $region26: #{gru_cell_forward.1} parent=0 // pred_check
    _
  $region27: #{gru_cell_forward.1} parent=0 // pred_check_branch
    %484 = sbr.rel (0) target = $region29
  $region28: #{gru_cell_forward.1} parent=0 // pred_region
    _
  $region29: #{gru_cell_forward.1} parent=0 // pred_fallthru
    _

</llo_original>
